<compile_context>
chip_gen: v7x
topology: tpu7x:2x2x1
jax: 0.10.0
libtpu: 0.0.40
codegen_flags: <defaults>
</compile_context>

<pallas_src>
import jax
import jax.numpy as jnp
from jax import lax
from jax.experimental import pallas as pl
from jax.experimental.pallas import tpu as pltpu


def _make_network_kernel(n_layers):
    """Kernel over one (features, TB) batch tile; statically unrolled stages."""

    def kernel(*refs):
        # refs = (x_ref, [c2g, gcc, gamma, w, b] * n_layers, o_ref)
        x_ref = refs[0]
        o_ref = refs[-1]
        act = x_ref[...].astype(jnp.float32)                  # (D, TB)

        for i in range(n_layers):
            c2g_ref, gcc_ref, g_ref, w_ref, b_ref = refs[1 + 5 * i: 1 + 5 * (i + 1)]

            # gamma*||x||^2 along features (sublane reduce, XLU).
            xx = jnp.sum(act * act, axis=0, keepdims=True)    # (1, TB)  f32

            # (2*gamma*c) @ x : MXU, batch on the N axis, f32 accumulation.
            xc2 = lax.dot_general(                            # (C, TB)
                c2g_ref[...], act.astype(c2g_ref.dtype),
                dimension_numbers=(((1,), (0,)), ((), ())),
                preferred_element_type=jnp.float32)

            # d2g = gamma*||x - c_eff||^2  (gamma/||c||^2 terms precomputed).
            d2g = jnp.maximum(g_ref[...] * xx + gcc_ref[...] - xc2, 0.0)
            phi = jnp.exp(-d2g)                               # (C, TB)  EUP

            # Linear: W @ phi + b  (batch stays on lanes; no transposes).
            act = lax.dot_general(                            # (O, TB)
                w_ref[...], phi.astype(w_ref.dtype),
                dimension_numbers=(((1,), (0,)), ((), ())),
                preferred_element_type=jnp.float32) + b_ref[...]

        o_ref[...] = act.astype(o_ref.dtype)                  # lane-dense store

    return kernel


def prepare_params(params, mxu_dtype=jnp.bfloat16):
    """One-time prep: gamma folding, ||c||^2, casts, column-vector reshapes."""
    prepared = []
    for centres, log_sigmas, weight, bias in params:
        c = centres.astype(jnp.float32)                                   # (C, D)
        gamma = jnp.exp(-2.0 * log_sigmas.astype(jnp.float32))[:, None]   # (C, 1)
        c2g = (2.0 * gamma * c).astype(mxu_dtype)                         # (C, D)
        # Use the effectively-rounded centres for ||c||^2 so the cross term
        # and the quadratic term are consistent on the bf16 path.
        c_eff = c2g.astype(jnp.float32) / (2.0 * gamma)
        gcc = gamma * jnp.sum(c_eff * c_eff, axis=1, keepdims=True)       # (C, 1)
        prepared.append((
            c2g,
            gcc,
            gamma,
            weight.astype(mxu_dtype),                                     # (O, C)
            bias.astype(jnp.float32)[:, None],                            # (O, 1)
        ))
    return prepared


def _choose_tb(b_pad, max_tb=2048):
    """Largest lane-aligned tile; prefer >=2 grid steps (v7x megacore)."""
    for t in (2048, 1024, 512, 256, 128):
        if t <= max_tb and b_pad % t == 0 and b_pad // t >= 2:
            return t
    return min(b_pad, max_tb)   # tiny batches: single grid step


def network_forward(x, prepared, tb=None):
    """Fused forward pass: one pallas_call for the entire network."""
    B, D = x.shape
    n_layers = len(prepared)
    O = prepared[-1][3].shape[0]

    # Batch on lanes: work on x^T, pad batch up to a 128-lane multiple.
    xt = x.astype(jnp.float32).T                              # (D, B)
    b_pad = ((B + 127) // 128) * 128
    if b_pad != B:
        xt = jnp.pad(xt, ((0, 0), (0, b_pad - B)))

    if tb is None:
        tb = _choose_tb(b_pad)
    assert b_pad % tb == 0 and tb % 128 == 0, "tile must be a 128-lane multiple"
    grid = (b_pad // tb,)

    in_specs = [pl.BlockSpec((D, tb), lambda i: (0, i))]
    flat_params = []
    for layer in prepared:
        for p in layer:
            # Params: full-array blocks, constant index -> resident across tiles.
            in_specs.append(pl.BlockSpec(p.shape, lambda i: (0, 0)))
            flat_params.append(p)

    # VMEM budget guard (binding on v7x: 64 MiB physical, 32 MiB scoped here):
    # double-buffered in/out tiles + (double-buffered) params + per-stage
    # (C, tb) intermediates.
    param_bytes = sum(int(p.size) * p.dtype.itemsize
                      for layer in prepared for p in layer)
    c_max = max(layer[0].shape[0] for layer in prepared)
    vmem_est = 2 * 4 * tb * (D + O) + 2 * param_bytes + 3 * 4 * c_max * tb
    assert vmem_est < 28 * 1024 * 1024, (
        f"estimated VMEM {vmem_est} B too large for 32 MiB budget; shrink tb")

    out_t = pl.pallas_call(
        _make_network_kernel(n_layers),
        out_shape=jax.ShapeDtypeStruct((O, b_pad), jnp.float32),
        grid=grid,
        in_specs=in_specs,
        out_specs=pl.BlockSpec((O, tb), lambda i: (0, i)),
        compiler_params=pltpu.CompilerParams(
            dimension_semantics=("parallel",),          # megacore sharding on v7x
            vmem_limit_bytes=32 * 1024 * 1024,
        ),
    )(xt, *flat_params)

    return out_t[:, :B].T                                     # back to (B, O)


def init_network_params(key, layer_widths, layer_centres):
    """Deterministic init mirroring Network.__init__ shapes.

    RBF(in=layer_widths[i], out=layer_centres[i]):
        centres ~ N(0, 1) of shape (centres, in); log_sigmas = 0.
    Linear(layer_centres[i], layer_widths[i+1]):
        weight, bias ~ U(-k, k), k = 1/sqrt(fan_in).
    """
    params = []
    for i in range(len(layer_widths) - 1):
        d_in = layer_widths[i]
        n_c = layer_centres[i]
        d_out = layer_widths[i + 1]
        key, k1, k2, k3 = jax.random.split(key, 4)
        centres = jax.random.normal(k1, (n_c, d_in), dtype=jnp.float32)
        log_sigmas = jnp.zeros((n_c,), dtype=jnp.float32)
        bound = 1.0 / jnp.sqrt(jnp.float32(n_c))
        weight = jax.random.uniform(k2, (d_out, n_c), jnp.float32,
                                    minval=-bound, maxval=bound)
        bias = jax.random.uniform(k3, (d_out,), jnp.float32,
                                  minval=-bound, maxval=bound)
        params.append((centres, log_sigmas, weight, bias))
    return params


def network_forward_ref(x, params):
    """Pure-JAX reference matching the PyTorch forward (pairwise-diff form)."""
    out = x
    for (centres, log_sigmas, weight, bias) in params:
        diff = out[:, None, :] - centres[None, :, :]                  # (B, C, D)
        dist = jnp.sqrt(jnp.sum(diff * diff, axis=-1)) / jnp.exp(log_sigmas)[None, :]
        phi = jnp.exp(-(dist * dist))                                 # gaussian basis
        out = phi @ weight.T + bias[None, :]
    return out


if __name__ == "__main__":
    # Small shapes consistent with the module: two (RBF -> Linear) stages.
    layer_widths = [16, 8, 4]      # input dim 16 -> hidden 8 -> output 4
    layer_centres = [32, 16]       # RBF centre counts per stage
    batch = 64                     # padded to 128 lanes, single grid step

    key = jax.random.PRNGKey(0)
    key, kx = jax.random.split(key)
    x = jax.random.normal(kx, (batch, layer_widths[0]), dtype=jnp.float32)
    params = init_network_params(key, layer_widths, layer_centres)

    ref = network_forward_ref(x, params)

    # f32 MXU operands: exact-path check against the reference.
    out_f32 = network_forward(x, prepare_params(params, jnp.float32))
    out_f32 = jax.block_until_ready(out_f32)
    assert out_f32.shape == (batch, layer_widths[-1])
    assert jnp.allclose(out_f32, ref, atol=1e-4, rtol=1e-4), "f32 mismatch vs reference"

    # bf16 MXU operands (default, MXU-native on v5e/v6e/v7x): f32 accumulation.
    out_bf16 = network_forward(x, prepare_params(params, jnp.bfloat16))
    out_bf16 = jax.block_until_ready(out_bf16)
    assert out_bf16.shape == (batch, layer_widths[-1])
    assert jnp.allclose(out_bf16, ref, atol=3e-2, rtol=3e-2), "bf16 mismatch vs reference"

    print("KERNEL_OK")
</pallas_src>

<mosaic_0001>
module attributes {stable_mosaic.version = 11 : i64} {
  func.func @kernel(%arg0: i32, %arg1: memref<16x128xf32, #tpu.memory_space<vmem>>, %arg2: memref<32x16xf32, #tpu.memory_space<vmem>>, %arg3: memref<32x1xf32, #tpu.memory_space<vmem>>, %arg4: memref<32x1xf32, #tpu.memory_space<vmem>>, %arg5: memref<8x32xf32, #tpu.memory_space<vmem>>, %arg6: memref<8x1xf32, #tpu.memory_space<vmem>>, %arg7: memref<16x8xf32, #tpu.memory_space<vmem>>, %arg8: memref<16x1xf32, #tpu.memory_space<vmem>>, %arg9: memref<16x1xf32, #tpu.memory_space<vmem>>, %arg10: memref<4x16xf32, #tpu.memory_space<vmem>>, %arg11: memref<4x1xf32, #tpu.memory_space<vmem>>, %arg12: memref<4x128xf32, #tpu.memory_space<vmem>>) attributes {dimension_semantics = [#tpu.dimension_semantics<parallel>], iteration_bounds = array<i64: 1>, scalar_prefetch = 0 : i64, scratch_operands = 0 : i64, tpu.core_type = #tpu.core_type<tc>, window_params = [{transform_indices = @transform_0, window_bounds = array<i64: 16, 128>}, {pipeline_mode = #tpu.pipeline_mode<synchronous>, transform_indices = @transform_1, window_bounds = array<i64: 32, 16>}, {pipeline_mode = #tpu.pipeline_mode<synchronous>, transform_indices = @transform_2, window_bounds = array<i64: 32, 1>}, {pipeline_mode = #tpu.pipeline_mode<synchronous>, transform_indices = @transform_3, window_bounds = array<i64: 32, 1>}, {pipeline_mode = #tpu.pipeline_mode<synchronous>, transform_indices = @transform_4, window_bounds = array<i64: 8, 32>}, {pipeline_mode = #tpu.pipeline_mode<synchronous>, transform_indices = @transform_5, window_bounds = array<i64: 8, 1>}, {pipeline_mode = #tpu.pipeline_mode<synchronous>, transform_indices = @transform_6, window_bounds = array<i64: 16, 8>}, {pipeline_mode = #tpu.pipeline_mode<synchronous>, transform_indices = @transform_7, window_bounds = array<i64: 16, 1>}, {pipeline_mode = #tpu.pipeline_mode<synchronous>, transform_indices = @transform_8, window_bounds = array<i64: 16, 1>}, {pipeline_mode = #tpu.pipeline_mode<synchronous>, transform_indices = @transform_9, window_bounds = array<i64: 4, 16>}, {pipeline_mode = #tpu.pipeline_mode<synchronous>, transform_indices = @transform_10, window_bounds = array<i64: 4, 1>}, {transform_indices = @transform_11, window_bounds = array<i64: 4, 128>}]} {
    %c0 = arith.constant 0 : index
    %c0_0 = arith.constant 0 : index
    %0 = vector.load %arg1[%c0, %c0_0] : memref<16x128xf32, #tpu.memory_space<vmem>>, vector<16x128xf32>
    %1 = arith.mulf %0, %0 : vector<16x128xf32>
    %cst = arith.constant dense<0.000000e+00> : vector<128xf32>
    %2 = vector.multi_reduction <add>, %1, %cst [0] : vector<16x128xf32> to vector<128xf32>
    %3 = vector.shape_cast %2 : vector<128xf32> to vector<1x128xf32>
    %c0_1 = arith.constant 0 : index
    %c0_2 = arith.constant 0 : index
    %4 = vector.load %arg2[%c0_1, %c0_2] : memref<32x16xf32, #tpu.memory_space<vmem>>, vector<32x16xf32>
    %cst_3 = arith.constant dense<0.000000e+00> : vector<32x128xf32>
    %5 = tpu.matmul %4, %0, %cst_3 {dimension_numbers = #tpu.dot_dimension_numbers<[1], [0], [0], [1], [0, 0, 1, 1], [], []>} : vector<32x16xf32>, vector<16x128xf32>, vector<32x128xf32> -> vector<32x128xf32>
    %c0_4 = arith.constant 0 : index
    %c0_5 = arith.constant 0 : index
    %6 = vector.load %arg4[%c0_4, %c0_5] : memref<32x1xf32, #tpu.memory_space<vmem>>, vector<32x1xf32>
    %7 = vector.broadcast %6 : vector<32x1xf32> to vector<32x128xf32>
    %8 = vector.broadcast %3 : vector<1x128xf32> to vector<32x128xf32>
    %9 = arith.mulf %7, %8 : vector<32x128xf32>
    %c0_6 = arith.constant 0 : index
    %c0_7 = arith.constant 0 : index
    %10 = vector.load %arg3[%c0_6, %c0_7] : memref<32x1xf32, #tpu.memory_space<vmem>>, vector<32x1xf32>
    %11 = vector.broadcast %10 : vector<32x1xf32> to vector<32x128xf32>
    %12 = arith.addf %9, %11 : vector<32x128xf32>
    %13 = arith.subf %12, %5 : vector<32x128xf32>
    %cst_8 = arith.constant 0.000000e+00 : f32
    %14 = vector.broadcast %cst_8 : f32 to vector<32x128xf32>
    %15 = arith.maximumf %13, %14 : vector<32x128xf32>
    %cst_9 = arith.constant 0.000000e+00 : f32
    %16 = vector.broadcast %cst_9 : f32 to vector<32x128xf32>
    %17 = arith.subf %16, %15 : vector<32x128xf32>
    %18 = math.exp %17 : vector<32x128xf32>
    %c0_10 = arith.constant 0 : index
    %c0_11 = arith.constant 0 : index
    %19 = vector.load %arg5[%c0_10, %c0_11] : memref<8x32xf32, #tpu.memory_space<vmem>>, vector<8x32xf32>
    %cst_12 = arith.constant dense<0.000000e+00> : vector<8x128xf32>
    %20 = tpu.matmul %19, %18, %cst_12 {dimension_numbers = #tpu.dot_dimension_numbers<[1], [0], [0], [1], [0, 0, 1, 1], [], []>} : vector<8x32xf32>, vector<32x128xf32>, vector<8x128xf32> -> vector<8x128xf32>
    %c0_13 = arith.constant 0 : index
    %c0_14 = arith.constant 0 : index
    %21 = vector.load %arg6[%c0_13, %c0_14] : memref<8x1xf32, #tpu.memory_space<vmem>>, vector<8x1xf32>
    %22 = vector.broadcast %21 : vector<8x1xf32> to vector<8x128xf32>
    %23 = arith.addf %20, %22 : vector<8x128xf32>
    %24 = arith.mulf %23, %23 : vector<8x128xf32>
    %cst_15 = arith.constant dense<0.000000e+00> : vector<128xf32>
    %25 = vector.multi_reduction <add>, %24, %cst_15 [0] : vector<8x128xf32> to vector<128xf32>
    %26 = vector.shape_cast %25 : vector<128xf32> to vector<1x128xf32>
    %c0_16 = arith.constant 0 : index
    %c0_17 = arith.constant 0 : index
    %27 = vector.load %arg7[%c0_16, %c0_17] : memref<16x8xf32, #tpu.memory_space<vmem>>, vector<16x8xf32>
    %cst_18 = arith.constant dense<0.000000e+00> : vector<16x128xf32>
    %28 = tpu.matmul %27, %23, %cst_18 {dimension_numbers = #tpu.dot_dimension_numbers<[1], [0], [0], [1], [0, 0, 1, 1], [], []>} : vector<16x8xf32>, vector<8x128xf32>, vector<16x128xf32> -> vector<16x128xf32>
    %c0_19 = arith.constant 0 : index
    %c0_20 = arith.constant 0 : index
    %29 = vector.load %arg9[%c0_19, %c0_20] : memref<16x1xf32, #tpu.memory_space<vmem>>, vector<16x1xf32>
    %30 = vector.broadcast %29 : vector<16x1xf32> to vector<16x128xf32>
    %31 = vector.broadcast %26 : vector<1x128xf32> to vector<16x128xf32>
    %32 = arith.mulf %30, %31 : vector<16x128xf32>
    %c0_21 = arith.constant 0 : index
    %c0_22 = arith.constant 0 : index
    %33 = vector.load %arg8[%c0_21, %c0_22] : memref<16x1xf32, #tpu.memory_space<vmem>>, vector<16x1xf32>
    %34 = vector.broadcast %33 : vector<16x1xf32> to vector<16x128xf32>
    %35 = arith.addf %32, %34 : vector<16x128xf32>
    %36 = arith.subf %35, %28 : vector<16x128xf32>
    %cst_23 = arith.constant 0.000000e+00 : f32
    %37 = vector.broadcast %cst_23 : f32 to vector<16x128xf32>
    %38 = arith.maximumf %36, %37 : vector<16x128xf32>
    %cst_24 = arith.constant 0.000000e+00 : f32
    %39 = vector.broadcast %cst_24 : f32 to vector<16x128xf32>
    %40 = arith.subf %39, %38 : vector<16x128xf32>
    %41 = math.exp %40 : vector<16x128xf32>
    %c0_25 = arith.constant 0 : index
    %c0_26 = arith.constant 0 : index
    %42 = vector.load %arg10[%c0_25, %c0_26] : memref<4x16xf32, #tpu.memory_space<vmem>>, vector<4x16xf32>
    %cst_27 = arith.constant dense<0.000000e+00> : vector<4x128xf32>
    %43 = tpu.matmul %42, %41, %cst_27 {dimension_numbers = #tpu.dot_dimension_numbers<[1], [0], [0], [1], [0, 0, 1, 1], [], []>} : vector<4x16xf32>, vector<16x128xf32>, vector<4x128xf32> -> vector<4x128xf32>
    %c0_28 = arith.constant 0 : index
    %c0_29 = arith.constant 0 : index
    %44 = vector.load %arg11[%c0_28, %c0_29] : memref<4x1xf32, #tpu.memory_space<vmem>>, vector<4x1xf32>
    %45 = vector.broadcast %44 : vector<4x1xf32> to vector<4x128xf32>
    %46 = arith.addf %43, %45 : vector<4x128xf32>
    %c0_30 = arith.constant 0 : index
    %c0_31 = arith.constant 0 : index
    %47 = vector.load %arg12[%c0_30, %c0_31] : memref<4x128xf32, #tpu.memory_space<vmem>>, vector<4x128xf32>
    tpu.vector_store %arg12[%c0_30, %c0_31], %46 {strides = array<i32>} : memref<4x128xf32, #tpu.memory_space<vmem>>, vector<4x128xf32>,
    return
  }
  func.func @transform_0(%arg0: i32) -> (i32, i32) {
    %c0_i32 = arith.constant 0 : i32
    %c0_i32_0 = arith.constant 0 : i32
    return %c0_i32, %arg0 : i32, i32
  }
  func.func @transform_1(%arg0: i32) -> (i32, i32) {
    %c0_i32 = arith.constant 0 : i32
    %c0_i32_0 = arith.constant 0 : i32
    %c0_i32_1 = arith.constant 0 : i32
    return %c0_i32, %c0_i32_0 : i32, i32
  }
  func.func @transform_2(%arg0: i32) -> (i32, i32) {
    %c0_i32 = arith.constant 0 : i32
    %c0_i32_0 = arith.constant 0 : i32
    %c0_i32_1 = arith.constant 0 : i32
    return %c0_i32, %c0_i32_0 : i32, i32
  }
  func.func @transform_3(%arg0: i32) -> (i32, i32) {
    %c0_i32 = arith.constant 0 : i32
    %c0_i32_0 = arith.constant 0 : i32
    %c0_i32_1 = arith.constant 0 : i32
    return %c0_i32, %c0_i32_0 : i32, i32
  }
  func.func @transform_4(%arg0: i32) -> (i32, i32) {
    %c0_i32 = arith.constant 0 : i32
    %c0_i32_0 = arith.constant 0 : i32
    %c0_i32_1 = arith.constant 0 : i32
    return %c0_i32, %c0_i32_0 : i32, i32
  }
  func.func @transform_5(%arg0: i32) -> (i32, i32) {
    %c0_i32 = arith.constant 0 : i32
    %c0_i32_0 = arith.constant 0 : i32
    %c0_i32_1 = arith.constant 0 : i32
    return %c0_i32, %c0_i32_0 : i32, i32
  }
  func.func @transform_6(%arg0: i32) -> (i32, i32) {
    %c0_i32 = arith.constant 0 : i32
    %c0_i32_0 = arith.constant 0 : i32
    %c0_i32_1 = arith.constant 0 : i32
    return %c0_i32, %c0_i32_0 : i32, i32
  }
  func.func @transform_7(%arg0: i32) -> (i32, i32) {
    %c0_i32 = arith.constant 0 : i32
    %c0_i32_0 = arith.constant 0 : i32
    %c0_i32_1 = arith.constant 0 : i32
    return %c0_i32, %c0_i32_0 : i32, i32
  }
  func.func @transform_8(%arg0: i32) -> (i32, i32) {
    %c0_i32 = arith.constant 0 : i32
    %c0_i32_0 = arith.constant 0 : i32
    %c0_i32_1 = arith.constant 0 : i32
    return %c0_i32, %c0_i32_0 : i32, i32
  }
  func.func @transform_9(%arg0: i32) -> (i32, i32) {
    %c0_i32 = arith.constant 0 : i32
    %c0_i32_0 = arith.constant 0 : i32
    %c0_i32_1 = arith.constant 0 : i32
    return %c0_i32, %c0_i32_0 : i32, i32
  }
  func.func @transform_10(%arg0: i32) -> (i32, i32) {
    %c0_i32 = arith.constant 0 : i32
    %c0_i32_0 = arith.constant 0 : i32
    %c0_i32_1 = arith.constant 0 : i32
    return %c0_i32, %c0_i32_0 : i32, i32
  }
  func.func @transform_11(%arg0: i32) -> (i32, i32) {
    %c0_i32 = arith.constant 0 : i32
    %c0_i32_0 = arith.constant 0 : i32
    return %c0_i32, %arg0 : i32, i32
  }
}

</mosaic_0001>

<llo_original>
// kernel: tpu_custom_call.1
$region0: #{tpu_custom_call.1}
  #allocation0 [shape = 'u32[]', space=smem, size = 0x4, offset = 0x4, fixed_abs, tag = 'smem constant byte address 0x4 - core index']
  #allocation1 [shape = 'u32[144,128]{1,0:T(1,128)}', space=vmem, size = 0x12000, scoped, tag = 'internal scratch']
  %s0 = inlined_call_operand.vmem [shape: f32[16,128], index: 0, kind: input, shape index: {}]
  %s1 = inlined_call_operand.vmem [shape: f32[32,16], index: 1, kind: input, shape index: {}]
  %s2 = inlined_call_operand.vmem [shape: f32[32,1], index: 2, kind: input, shape index: {}]
  %s3 = inlined_call_operand.vmem [shape: f32[32,1], index: 3, kind: input, shape index: {}]
  %s4 = inlined_call_operand.vmem [shape: f32[8,32], index: 4, kind: input, shape index: {}]
  %s5 = inlined_call_operand.vmem [shape: f32[8,1], index: 5, kind: input, shape index: {}]
  %s6 = inlined_call_operand.vmem [shape: f32[16,8], index: 6, kind: input, shape index: {}]
  %s7 = inlined_call_operand.vmem [shape: f32[16,1], index: 7, kind: input, shape index: {}]
  %s8 = inlined_call_operand.vmem [shape: f32[16,1], index: 8, kind: input, shape index: {}]
  %s9 = inlined_call_operand.vmem [shape: f32[4,16], index: 9, kind: input, shape index: {}]
  %s10 = inlined_call_operand.vmem [shape: f32[4,1], index: 10, kind: input, shape index: {}]
  %s11 = inlined_call_operand.hbm [shape: f32[4,128], index: 11, kind: output, shape index: {}]
  %s12 = sld [smem:[#allocation0]]
  $region54: #{tpu_custom_call.1} parent=0
    _
  %s14 = ssub.s32 1, %s12
  %s15 = scalar_select 0, %s14, %s12
  $region1: #{tpu_custom_call.1} parent=0
    #allocation2 [shape = 'u8[2048]{0}', space=vmem, size = 0x800, scoped, tag = 'output window, operand 0, single buffered']
    #allocation3 [shape = 's32[1]{0}', space=sflag, size = 0x4, scoped, tag = 'scoped memory for tpu_custom_call.1']
    %16 = vsyncpa [#allocation3], 0
    // Predicated region
    $region2: #{tpu_custom_call.1} parent=1 // pred_check
      _
    $region3: #{tpu_custom_call.1} parent=1 // pred_check_branch
      %18 = sbr.rel (0) target = $region5
    $region4: #{tpu_custom_call.1} parent=1 // pred_region
      _
    $region5: #{tpu_custom_call.1} parent=1 // pred_fallthru
      _
    // Predicated region
    $region6: #{tpu_custom_call.1} parent=1 // pred_check
      _
    $region7: #{tpu_custom_call.1} parent=1 // pred_check_branch
      %20 = sbr.rel (0) target = $region9
    $region8: #{tpu_custom_call.1} parent=1 // pred_region
      _
    $region9: #{tpu_custom_call.1} parent=1 // pred_fallthru
      _
    // Predicated region
    $region10: #{tpu_custom_call.1} parent=1 // pred_check
      _
    $region11: #{tpu_custom_call.1} parent=1 // pred_check_branch
      %22 = sbr.rel (0) target = $region13
    $region12: #{tpu_custom_call.1} parent=1 // pred_region
      _
    $region13: #{tpu_custom_call.1} parent=1 // pred_fallthru
      _
    // Predicated region
    $region14: #{tpu_custom_call.1} parent=1 // pred_check
      _
    $region15: #{tpu_custom_call.1} parent=1 // pred_check_branch
      %24 = sbr.rel (0) target = $region17
    $region16: #{tpu_custom_call.1} parent=1 // pred_region
      _
    $region17: #{tpu_custom_call.1} parent=1 // pred_fallthru
      _
    // Predicated region
    $region18: #{tpu_custom_call.1} parent=1 // pred_check
      _
    $region19: #{tpu_custom_call.1} parent=1 // pred_check_branch
      %26 = sbr.rel (0) target = $region21
    $region20: #{tpu_custom_call.1} parent=1 // pred_region
      _
    $region21: #{tpu_custom_call.1} parent=1 // pred_fallthru
      _
    // Predicated region
    $region22: #{tpu_custom_call.1} parent=1 // pred_check
      _
    $region23: #{tpu_custom_call.1} parent=1 // pred_check_branch
      %28 = sbr.rel (0) target = $region25
    $region24: #{tpu_custom_call.1} parent=1 // pred_region
      _
    $region25: #{tpu_custom_call.1} parent=1 // pred_fallthru
      _
    // Predicated region
    $region26: #{tpu_custom_call.1} parent=1 // pred_check
      _
    $region27: #{tpu_custom_call.1} parent=1 // pred_check_branch
      %30 = sbr.rel (0) target = $region29
    $region28: #{tpu_custom_call.1} parent=1 // pred_region
      _
    $region29: #{tpu_custom_call.1} parent=1 // pred_fallthru
      _
    // Predicated region
    $region30: #{tpu_custom_call.1} parent=1 // pred_check
      _
    $region31: #{tpu_custom_call.1} parent=1 // pred_check_branch
      %32 = sbr.rel (0) target = $region33
    $region32: #{tpu_custom_call.1} parent=1 // pred_region
      _
    $region33: #{tpu_custom_call.1} parent=1 // pred_fallthru
      _
    // Predicated region
    $region34: #{tpu_custom_call.1} parent=1 // pred_check
      _
    $region35: #{tpu_custom_call.1} parent=1 // pred_check_branch
      %34 = sbr.rel (0) target = $region37
    $region36: #{tpu_custom_call.1} parent=1 // pred_region
      _
    $region37: #{tpu_custom_call.1} parent=1 // pred_fallthru
      _
    // Predicated region
    $region38: #{tpu_custom_call.1} parent=1 // pred_check
      _
    $region39: #{tpu_custom_call.1} parent=1 // pred_check_branch
      %36 = sbr.rel (0) target = $region41
    $region40: #{tpu_custom_call.1} parent=1 // pred_region
      _
    $region41: #{tpu_custom_call.1} parent=1 // pred_fallthru
      _
    // Predicated region
    $region42: #{tpu_custom_call.1} parent=1 // pred_check
      _
    $region43: #{tpu_custom_call.1} parent=1 // pred_check_branch
      %38 = sbr.rel (0) target = $region45
    $region44: #{tpu_custom_call.1} parent=1 // pred_region
      _
    $region45: #{tpu_custom_call.1} parent=1 // pred_fallthru
      _
    %v39 = vld [vmem:[%s0] sm:$0xff]
    %v40 = vld [vmem:[%s0 + $0x8] sm:$0xff]
    %v41 = vmul.f32 %v39, %v39
    %v42 = vmul.f32 %v40, %v40
    %v43 = vadd.f32 %v41, %v42
    %v44 = vrot.slane %v43, 4
    %v45 = vadd.f32 %v43, %v44
    %v46 = vrot.slane %v45, 2
    %v47 = vadd.f32 %v45, %v46
    %v48 = vrot.slane %v47, 1
    %v49 = vadd.f32 %v47, %v48
    %v50 = vld [vmem:[%s1] sm:$0xff]
    %v51 = vld [vmem:[%s1 + $0x8] sm:$0xff]
    %v52 = vld [vmem:[%s1 + $0x10] sm:$0xff]
    %v53 = vld [vmem:[%s1 + $0x18] sm:$0xff]
    %vm54 = vcmask 130048
    %v56 = vsel %vm54, %v50, 0
    %v59 = vsel %vm54, %v51, 0
    %v62 = vsel %vm54, %v52, 0
    %v65 = vsel %vm54, %v53, 0
    %67 = vmatprep.subr.mxu0 0.0
    %68 = vmatpush1.msra.mxu0 %v39
    %69 = vmatprep.subr.mxu0 0.0
    %70 = vmatpush1.msra.mxu0 %v40
    %71 = vmatprep.subr.mxu0 0.0
    %72 = vmatpush1.msra.mxu0 0.0
    %73 = vmatprep.subr.mxu0 0.0
    %74 = vmatpush1.msra.mxu0 0.0
    %75 = vmatprep.subr.mxu0 0.0
    %76 = vmatpush1.msra.mxu0 0.0
    %77 = vmatprep.subr.mxu0 0.0
    %78 = vmatpush1.msra.mxu0 0.0
    %79 = vmatprep.subr.mxu0 0.0
    %80 = vmatpush1.msra.mxu0 0.0
    %81 = vmatprep.subr.mxu0 0.0
    %82 = vmatpush1.msra.mxu0 0.0
    %83 = vmatprep.subr.mxu0 0.0
    %84 = vmatpush1.msra.mxu0 0.0
    %85 = vmatprep.subr.mxu0 0.0
    %86 = vmatpush1.msra.mxu0 0.0
    %87 = vmatprep.subr.mxu0 0.0
    %88 = vmatpush1.msra.mxu0 0.0
    %89 = vmatprep.subr.mxu0 0.0
    %90 = vmatpush1.msra.mxu0 0.0
    %91 = vmatprep.subr.mxu0 0.0
    %92 = vmatpush1.msra.mxu0 0.0
    %93 = vmatprep.subr.mxu0 0.0
    %94 = vmatpush1.msra.mxu0 0.0
    %95 = vmatprep.subr.mxu0 0.0
    %96 = vmatpush1.msra.mxu0 0.0
    %97 = vmatprep.subr.mxu0 0.0
    %98 = vmatpush1.msra.mxu0 0.0
    %99 = vmatprep.subr.mxu0 0.0
    %100 = vmatpush1.msra.mxu0 0.0
    %101 = vmatprep.subr.mxu0 0.0
    %102 = vmatpush1.msra.mxu0 0.0
    %103 = vmatprep.subr.mxu0 0.0
    %104 = vmatpush1.msra.mxu0 0.0
    %105 = vmatprep.subr.mxu0 0.0
    %106 = vmatpush1.msra.mxu0 0.0
    %107 = vmatprep.subr.mxu0 0.0
    %108 = vmatpush1.msra.mxu0 0.0
    %109 = vmatprep.subr.mxu0 0.0
    %110 = vmatpush1.msra.mxu0 0.0
    %111 = vmatprep.subr.mxu0 0.0
    %112 = vmatpush1.msra.mxu0 0.0
    %113 = vmatprep.subr.mxu0 0.0
    %114 = vmatpush1.msra.mxu0 0.0
    %115 = vmatprep.subr.mxu0 0.0
    %116 = vmatpush1.msra.mxu0 0.0
    %117 = vmatprep.subr.mxu0 0.0
    %118 = vmatpush1.msra.mxu0 0.0
    %119 = vmatprep.subr.mxu0 0.0
    %120 = vmatpush1.msra.mxu0 0.0
    %121 = vmatprep.subr.mxu0 0.0
    %122 = vmatpush1.msra.mxu0 0.0
    %123 = vmatprep.subr.mxu0 0.0
    %124 = vmatpush1.msra.mxu0 0.0
    %125 = vmatprep.subr.mxu0 0.0
    %126 = vmatpush1.msra.mxu0 0.0
    %127 = vmatprep.subr.mxu0 0.0
    %128 = vmatpush1.msra.mxu0 0.0
    %129 = vmatprep.subr.mxu0 0.0
    %130 = vmatpush1.msra.mxu0 0.0
    %131 = vmatprep.mubr.f32.mxu0 0.0
    %132 = vmatmul.mubr.f32.gmra.mrb[0].mxu0 %v56
    %v133 = vpop.f32.mrb[0].mxu0
    %v134 = vadd.f32 0.0, %v133
    %v135 = vpop.f32.mrb[0].mxu0
    %136 = vmatprep.mubr.f32.mxu0 0.0
    %137 = vmatmul.mubr.f32.gmra.mrb[0].mxu0 %v59
    %v138 = vpop.f32.mrb[0].mxu0
    %v139 = vadd.f32 0.0, %v138
    %v140 = vpop.f32.mrb[0].mxu0
    %141 = vmatprep.mubr.f32.mxu0 0.0
    %142 = vmatmul.mubr.f32.gmra.mrb[0].mxu0 %v62
    %v143 = vpop.f32.mrb[0].mxu0
    %v144 = vadd.f32 0.0, %v143
    %v145 = vpop.f32.mrb[0].mxu0
    %146 = vmatprep.mubr.f32.mxu0 0.0
    %147 = vmatmul.mubr.f32.gmra.mrb[0].mxu0 %v65
    %v148 = vpop.f32.mrb[0].mxu0
    %v149 = vadd.f32 0.0, %v148
    %v150 = vpop.f32.mrb[0].mxu0
    %151 = vdwg.mxu0
    %v152 = vld [vmem:[%s3] sm:$0xff]
    %v153 = vld [vmem:[%s3 + $0x8] sm:$0xff]
    %v154 = vld [vmem:[%s3 + $0x10] sm:$0xff]
    %v155 = vld [vmem:[%s3 + $0x18] sm:$0xff]
    %157 = vset.pattern.permute.xlu0 0
    %158 = vperm.xlu0 %157, %v152
    %v159 = vpop.permute.xlu0 %158
    %162 = vset.pattern.permute.xlu0 0
    %163 = vperm.xlu0 %162, %v153
    %v164 = vpop.permute.xlu0 %163
    %167 = vset.pattern.permute.xlu0 0
    %168 = vperm.xlu0 %167, %v154
    %v169 = vpop.permute.xlu0 %168
    %172 = vset.pattern.permute.xlu0 0
    %173 = vperm.xlu0 %172, %v155
    %v174 = vpop.permute.xlu0 %173
    %v176 = vmul.f32 %v159, %v49
    %v177 = vmul.f32 %v164, %v49
    %v178 = vmul.f32 %v169, %v49
    %v179 = vmul.f32 %v174, %v49
    %v180 = vld [vmem:[%s2] sm:$0xff]
    %v181 = vld [vmem:[%s2 + $0x8] sm:$0xff]
    %v182 = vld [vmem:[%s2 + $0x10] sm:$0xff]
    %v183 = vld [vmem:[%s2 + $0x18] sm:$0xff]
    %185 = vset.pattern.permute.xlu0 0
    %186 = vperm.xlu0 %185, %v180
    %v187 = vpop.permute.xlu0 %186
    %190 = vset.pattern.permute.xlu0 0
    %191 = vperm.xlu0 %190, %v181
    %v192 = vpop.permute.xlu0 %191
    %195 = vset.pattern.permute.xlu0 0
    %196 = vperm.xlu0 %195, %v182
    %v197 = vpop.permute.xlu0 %196
    %200 = vset.pattern.permute.xlu0 0
    %201 = vperm.xlu0 %200, %v183
    %v202 = vpop.permute.xlu0 %201
    %v204 = vadd.f32 %v176, %v187
    %v205 = vadd.f32 %v177, %v192
    %v206 = vadd.f32 %v178, %v197
    %v207 = vadd.f32 %v179, %v202
    %v208 = vsub.f32 %v204, %v134
    %v209 = vsub.f32 %v205, %v139
    %v210 = vsub.f32 %v206, %v144
    %v211 = vsub.f32 %v207, %v149
    %v212 = vmax.f32 %v208, 0.0
    %v213 = vmax.f32 %v209, 0.0
    %v214 = vmax.f32 %v210, 0.0
    %v215 = vmax.f32 %v211, 0.0
    %v216 = vsub.f32 0.0, %v212
    %v217 = vsub.f32 0.0, %v213
    %v218 = vsub.f32 0.0, %v214
    %v219 = vsub.f32 0.0, %v215
    %v220 = vmul.f32 %v216, 1.442695
    %v221 = vpow.pop %v220
    %v222 = vmul.f32 %v217, 1.442695
    %v223 = vpow.pop %v222
    %v224 = vmul.f32 %v218, 1.442695
    %v225 = vpow.pop %v224
    %v226 = vmul.f32 %v219, 1.442695
    %v227 = vpow.pop %v226
    %v228 = vld [vmem:[%s4] sm:$0xff]
    %v229 = vld [vmem:[%s5] sm:$0xff]
    %231 = vset.pattern.permute.xlu0 0
    %232 = vperm.xlu0 %231, %v229
    %v233 = vpop.permute.xlu0 %232
    %vm235 = vcmask 261120
    %v237 = vsel %vm235, %v228, 0
    %239 = vmatprep.subr.mxu0 0.0
    %240 = vmatpush1.msra.mxu0 %v221
    %241 = vmatprep.subr.mxu0 0.0
    %242 = vmatpush1.msra.mxu0 %v223
    %243 = vmatprep.subr.mxu0 0.0
    %244 = vmatpush1.msra.mxu0 %v225
    %245 = vmatprep.subr.mxu0 0.0
    %246 = vmatpush1.msra.mxu0 %v227
    %247 = vmatprep.subr.mxu0 0.0
    %248 = vmatpush1.msra.mxu0 0.0
    %249 = vmatprep.subr.mxu0 0.0
    %250 = vmatpush1.msra.mxu0 0.0
    %251 = vmatprep.subr.mxu0 0.0
    %252 = vmatpush1.msra.mxu0 0.0
    %253 = vmatprep.subr.mxu0 0.0
    %254 = vmatpush1.msra.mxu0 0.0
    %255 = vmatprep.subr.mxu0 0.0
    %256 = vmatpush1.msra.mxu0 0.0
    %257 = vmatprep.subr.mxu0 0.0
    %258 = vmatpush1.msra.mxu0 0.0
    %259 = vmatprep.subr.mxu0 0.0
    %260 = vmatpush1.msra.mxu0 0.0
    %261 = vmatprep.subr.mxu0 0.0
    %262 = vmatpush1.msra.mxu0 0.0
    %263 = vmatprep.subr.mxu0 0.0
    %264 = vmatpush1.msra.mxu0 0.0
    %265 = vmatprep.subr.mxu0 0.0
    %266 = vmatpush1.msra.mxu0 0.0
    %267 = vmatprep.subr.mxu0 0.0
    %268 = vmatpush1.msra.mxu0 0.0
    %269 = vmatprep.subr.mxu0 0.0
    %270 = vmatpush1.msra.mxu0 0.0
    %271 = vmatprep.subr.mxu0 0.0
    %272 = vmatpush1.msra.mxu0 0.0
    %273 = vmatprep.subr.mxu0 0.0
    %274 = vmatpush1.msra.mxu0 0.0
    %275 = vmatprep.subr.mxu0 0.0
    %276 = vmatpush1.msra.mxu0 0.0
    %277 = vmatprep.subr.mxu0 0.0
    %278 = vmatpush1.msra.mxu0 0.0
    %279 = vmatprep.subr.mxu0 0.0
    %280 = vmatpush1.msra.mxu0 0.0
    %281 = vmatprep.subr.mxu0 0.0
    %282 = vmatpush1.msra.mxu0 0.0
    %283 = vmatprep.subr.mxu0 0.0
    %284 = vmatpush1.msra.mxu0 0.0
    %285 = vmatprep.subr.mxu0 0.0
    %286 = vmatpush1.msra.mxu0 0.0
    %287 = vmatprep.subr.mxu0 0.0
    %288 = vmatpush1.msra.mxu0 0.0
    %289 = vmatprep.subr.mxu0 0.0
    %290 = vmatpush1.msra.mxu0 0.0
    %291 = vmatprep.subr.mxu0 0.0
    %292 = vmatpush1.msra.mxu0 0.0
    %293 = vmatprep.subr.mxu0 0.0
    %294 = vmatpush1.msra.mxu0 0.0
    %295 = vmatprep.subr.mxu0 0.0
    %296 = vmatpush1.msra.mxu0 0.0
    %297 = vmatprep.subr.mxu0 0.0
    %298 = vmatpush1.msra.mxu0 0.0
    %299 = vmatprep.subr.mxu0 0.0
    %300 = vmatpush1.msra.mxu0 0.0
    %301 = vmatprep.subr.mxu0 0.0
    %302 = vmatpush1.msra.mxu0 0.0
    %303 = vmatprep.mubr.f32.mxu0 0.0
    %304 = vmatmul.mubr.f32.gmra.mrb[0].mxu0 %v237
    %v305 = vpop.f32.mrb[0].mxu0
    %v306 = vadd.f32 %v233, %v305
    %v307 = vpop.f32.mrb[0].mxu0
    %308 = vdwg.mxu0
    %v309 = vmul.f32 %v306, %v306
    %v310 = vrot.slane %v309, 4
    %v311 = vadd.f32 %v309, %v310
    %v312 = vrot.slane %v311, 2
    %v313 = vadd.f32 %v311, %v312
    %v314 = vrot.slane %v313, 1
    %v315 = vadd.f32 %v313, %v314
    %v316 = vld [vmem:[%s6] sm:$0xff]
    %v317 = vld [vmem:[%s6 + $0x8] sm:$0xff]
    %vm318 = vcmask 64512
    %v320 = vsel %vm318, %v316, 0
    %v323 = vsel %vm318, %v317, 0
    %325 = vmatprep.subr.mxu0 0.0
    %326 = vmatpush1.msra.mxu0 %v306
    %327 = vmatprep.subr.mxu0 0.0
    %328 = vmatpush1.msra.mxu0 0.0
    %329 = vmatprep.subr.mxu0 0.0
    %330 = vmatpush1.msra.mxu0 0.0
    %331 = vmatprep.subr.mxu0 0.0
    %332 = vmatpush1.msra.mxu0 0.0
    %333 = vmatprep.subr.mxu0 0.0
    %334 = vmatpush1.msra.mxu0 0.0
    %335 = vmatprep.subr.mxu0 0.0
    %336 = vmatpush1.msra.mxu0 0.0
    %337 = vmatprep.subr.mxu0 0.0
    %338 = vmatpush1.msra.mxu0 0.0
    %339 = vmatprep.subr.mxu0 0.0
    %340 = vmatpush1.msra.mxu0 0.0
    %341 = vmatprep.subr.mxu0 0.0
    %342 = vmatpush1.msra.mxu0 0.0
    %343 = vmatprep.subr.mxu0 0.0
    %344 = vmatpush1.msra.mxu0 0.0
    %345 = vmatprep.subr.mxu0 0.0
    %346 = vmatpush1.msra.mxu0 0.0
    %347 = vmatprep.subr.mxu0 0.0
    %348 = vmatpush1.msra.mxu0 0.0
    %349 = vmatprep.subr.mxu0 0.0
    %350 = vmatpush1.msra.mxu0 0.0
    %351 = vmatprep.subr.mxu0 0.0
    %352 = vmatpush1.msra.mxu0 0.0
    %353 = vmatprep.subr.mxu0 0.0
    %354 = vmatpush1.msra.mxu0 0.0
    %355 = vmatprep.subr.mxu0 0.0
    %356 = vmatpush1.msra.mxu0 0.0
    %357 = vmatprep.subr.mxu0 0.0
    %358 = vmatpush1.msra.mxu0 0.0
    %359 = vmatprep.subr.mxu0 0.0
    %360 = vmatpush1.msra.mxu0 0.0
    %361 = vmatprep.subr.mxu0 0.0
    %362 = vmatpush1.msra.mxu0 0.0
    %363 = vmatprep.subr.mxu0 0.0
    %364 = vmatpush1.msra.mxu0 0.0
    %365 = vmatprep.subr.mxu0 0.0
    %366 = vmatpush1.msra.mxu0 0.0
    %367 = vmatprep.subr.mxu0 0.0
    %368 = vmatpush1.msra.mxu0 0.0
    %369 = vmatprep.subr.mxu0 0.0
    %370 = vmatpush1.msra.mxu0 0.0
    %371 = vmatprep.subr.mxu0 0.0
    %372 = vmatpush1.msra.mxu0 0.0
    %373 = vmatprep.subr.mxu0 0.0
    %374 = vmatpush1.msra.mxu0 0.0
    %375 = vmatprep.subr.mxu0 0.0
    %376 = vmatpush1.msra.mxu0 0.0
    %377 = vmatprep.subr.mxu0 0.0
    %378 = vmatpush1.msra.mxu0 0.0
    %379 = vmatprep.subr.mxu0 0.0
    %380 = vmatpush1.msra.mxu0 0.0
    %381 = vmatprep.subr.mxu0 0.0
    %382 = vmatpush1.msra.mxu0 0.0
    %383 = vmatprep.subr.mxu0 0.0
    %384 = vmatpush1.msra.mxu0 0.0
    %385 = vmatprep.subr.mxu0 0.0
    %386 = vmatpush1.msra.mxu0 0.0
    %387 = vmatprep.subr.mxu0 0.0
    %388 = vmatpush1.msra.mxu0 0.0
    %389 = vmatprep.mubr.f32.mxu0 0.0
    %390 = vmatmul.mubr.f32.gmra.mrb[0].mxu0 %v320
    %v391 = vpop.f32.mrb[0].mxu0
    %v392 = vadd.f32 0.0, %v391
    %v393 = vpop.f32.mrb[0].mxu0
    %394 = vmatprep.mubr.f32.mxu0 0.0
    %395 = vmatmul.mubr.f32.gmra.mrb[0].mxu0 %v323
    %v396 = vpop.f32.mrb[0].mxu0
    %v397 = vadd.f32 0.0, %v396
    %v398 = vpop.f32.mrb[0].mxu0
    %399 = vdwg.mxu0
    %v400 = vld [vmem:[%s8] sm:$0xff]
    %v401 = vld [vmem:[%s8 + $0x8] sm:$0xff]
    %403 = vset.pattern.permute.xlu0 0
    %404 = vperm.xlu0 %403, %v400
    %v405 = vpop.permute.xlu0 %404
    %408 = vset.pattern.permute.xlu0 0
    %409 = vperm.xlu0 %408, %v401
    %v410 = vpop.permute.xlu0 %409
    %v412 = vmul.f32 %v405, %v315
    %v413 = vmul.f32 %v410, %v315
    %v414 = vld [vmem:[%s7] sm:$0xff]
    %v415 = vld [vmem:[%s7 + $0x8] sm:$0xff]
    %417 = vset.pattern.permute.xlu0 0
    %418 = vperm.xlu0 %417, %v414
    %v419 = vpop.permute.xlu0 %418
    %422 = vset.pattern.permute.xlu0 0
    %423 = vperm.xlu0 %422, %v415
    %v424 = vpop.permute.xlu0 %423
    %v426 = vadd.f32 %v412, %v419
    %v427 = vadd.f32 %v413, %v424
    %v428 = vsub.f32 %v426, %v392
    %v429 = vsub.f32 %v427, %v397
    %v430 = vmax.f32 %v428, 0.0
    %v431 = vmax.f32 %v429, 0.0
    %v432 = vsub.f32 0.0, %v430
    %v433 = vsub.f32 0.0, %v431
    %v434 = vmul.f32 %v432, 1.442695
    %v435 = vpow.pop %v434
    %v436 = vmul.f32 %v433, 1.442695
    %v437 = vpow.pop %v436
    %v438 = vld [vmem:[%s9] sm:$0xf]
    %v439 = vld [vmem:[%s10] sm:$0xf]
    %441 = vset.pattern.permute.xlu0 0
    %442 = vperm.xlu0 %441, %v439
    %v443 = vpop.permute.xlu0 %442
    %v446 = vsel %vm54, %v438, 0
    %448 = vmatprep.subr.mxu0 0.0
    %449 = vmatpush1.msra.mxu0 %v435
    %450 = vmatprep.subr.mxu0 0.0
    %451 = vmatpush1.msra.mxu0 %v437
    %452 = vmatprep.subr.mxu0 0.0
    %453 = vmatpush1.msra.mxu0 0.0
    %454 = vmatprep.subr.mxu0 0.0
    %455 = vmatpush1.msra.mxu0 0.0
    %456 = vmatprep.subr.mxu0 0.0
    %457 = vmatpush1.msra.mxu0 0.0
    %458 = vmatprep.subr.mxu0 0.0
    %459 = vmatpush1.msra.mxu0 0.0
    %460 = vmatprep.subr.mxu0 0.0
    %461 = vmatpush1.msra.mxu0 0.0
    %462 = vmatprep.subr.mxu0 0.0
    %463 = vmatpush1.msra.mxu0 0.0
    %464 = vmatprep.subr.mxu0 0.0
    %465 = vmatpush1.msra.mxu0 0.0
    %466 = vmatprep.subr.mxu0 0.0
    %467 = vmatpush1.msra.mxu0 0.0
    %468 = vmatprep.subr.mxu0 0.0
    %469 = vmatpush1.msra.mxu0 0.0
    %470 = vmatprep.subr.mxu0 0.0
    %471 = vmatpush1.msra.mxu0 0.0
    %472 = vmatprep.subr.mxu0 0.0
    %473 = vmatpush1.msra.mxu0 0.0
    %474 = vmatprep.subr.mxu0 0.0
    %475 = vmatpush1.msra.mxu0 0.0
    %476 = vmatprep.subr.mxu0 0.0
    %477 = vmatpush1.msra.mxu0 0.0
    %478 = vmatprep.subr.mxu0 0.0
    %479 = vmatpush1.msra.mxu0 0.0
    %480 = vmatprep.subr.mxu0 0.0
    %481 = vmatpush1.msra.mxu0 0.0
    %482 = vmatprep.subr.mxu0 0.0
    %483 = vmatpush1.msra.mxu0 0.0
    %484 = vmatprep.subr.mxu0 0.0
    %485 = vmatpush1.msra.mxu0 0.0
    %486 = vmatprep.subr.mxu0 0.0
    %487 = vmatpush1.msra.mxu0 0.0
    %488 = vmatprep.subr.mxu0 0.0
    %489 = vmatpush1.msra.mxu0 0.0
    %490 = vmatprep.subr.mxu0 0.0
    %491 = vmatpush1.msra.mxu0 0.0
    %492 = vmatprep.subr.mxu0 0.0
    %493 = vmatpush1.msra.mxu0 0.0
    %494 = vmatprep.subr.mxu0 0.0
    %495 = vmatpush1.msra.mxu0 0.0
    %496 = vmatprep.subr.mxu0 0.0
    %497 = vmatpush1.msra.mxu0 0.0
    %498 = vmatprep.subr.mxu0 0.0
    %499 = vmatpush1.msra.mxu0 0.0
    %500 = vmatprep.subr.mxu0 0.0
    %501 = vmatpush1.msra.mxu0 0.0
    %502 = vmatprep.subr.mxu0 0.0
    %503 = vmatpush1.msra.mxu0 0.0
    %504 = vmatprep.subr.mxu0 0.0
    %505 = vmatpush1.msra.mxu0 0.0
    %506 = vmatprep.subr.mxu0 0.0
    %507 = vmatpush1.msra.mxu0 0.0
    %508 = vmatprep.subr.mxu0 0.0
    %509 = vmatpush1.msra.mxu0 0.0
    %510 = vmatprep.subr.mxu0 0.0
    %511 = vmatpush1.msra.mxu0 0.0
    %512 = vmatprep.mubr.f32.mxu0 0.0
    %513 = vmatmul.mubr.f32.gmra.mrb[0].mxu0 %v446
    %v514 = vpop.f32.mrb[0].mxu0
    %v515 = vadd.f32 %v443, %v514
    %v516 = vpop.f32.mrb[0].mxu0
    %517 = vdwg.mxu0
    %518 = vst [vmem:[#allocation2] sm:$0xf] %v515
    // Predicated region
    $region46: #{tpu_custom_call.1} parent=1 // pred_check
      _
    $region47: #{tpu_custom_call.1} parent=1 // pred_check_branch
      %520 = sbr.rel (0) target = $region49
    $region48: #{tpu_custom_call.1} parent=1 // pred_region
      %s522 = ssub.s32 64, 64
      %523 = vsyncadd [#allocation3], %s522
      %s525 = sshll.u32 [#allocation2], 4
      %s526 = int_to_ptr.vmem [resolvable:$true] %s525
      %528 = dma.vmem_to_hbm [thread:$0]  %s526, 64, %s11, [#allocation3]
    $region49: #{tpu_custom_call.1} parent=1 // pred_fallthru
      _
    // Predicated region
    $region50: #{tpu_custom_call.1} parent=1 // pred_check
      _
    $region51: #{tpu_custom_call.1} parent=1 // pred_check_branch
      %530 = sbr.rel (0) target = $region53
    $region52: #{tpu_custom_call.1} parent=1 // pred_region
      %531 = dma.done [#allocation3], 64
    $region53: #{tpu_custom_call.1} parent=1 // pred_fallthru
      _
    %532 = vsyncpa [#allocation3], 1

</llo_original>
